<compile_context>
chip_gen: v5e
topology: v5e:2x2
jax: 0.10.0
libtpu: 0.0.40
codegen_flags: <defaults>
</compile_context>

<pallas_src>
import jax
import jax.numpy as jnp
from jax.experimental import pallas as pl
from jax.experimental.pallas import tpu as pltpu


def _detector_kernel(x_ref, w1_ref, b1_ref, w2_ref, b2_ref, out_ref):
    # Fused MLP: relu(x @ W1 + b1) @ W2p + b2p, f32 accumulation on the MXU.
    x = x_ref[...]                                                    # (TM, C)
    h = jnp.dot(x, w1_ref[...], preferred_element_type=jnp.float32)   # MXU
    h = jnp.maximum(h + b1_ref[...], 0.0)                             # VPU bias+ReLU (f32)
    y = jnp.dot(h, w2_ref[...], preferred_element_type=jnp.float32)   # MXU
    out_ref[...] = (y + b2_ref[...]).astype(out_ref.dtype)            # lane-dense 128-wide store


def detector_forward(x, w1, b1, w2, b2, *, row_tile=256):
    """x: (B, N, C) proposal features -> (B, N, out_dim) flat box corners."""
    B, N, C = x.shape
    H = w1.shape[1]
    out_dim = w2.shape[1]                       # 24 = 8 corners x 3 coords
    O_PAD = 128                                 # lane-dense output width

    # Zero-pad the output projection to a full 128-lane width. Padded columns
    # are exactly zero, so slicing [:, :out_dim] afterwards is exact.
    w2p = jnp.zeros((H, O_PAD), w2.dtype).at[:, :out_dim].set(w2)
    b2p = jnp.zeros((1, O_PAD), b2.dtype).at[:, :out_dim].set(b2)

    # Collapse (B, N) into one row axis.
    M = B * N
    xf = x.reshape(M, C)

    if M <= row_tile:
        # Toy / small case: one full-extent block, single program.
        tm = M
        m_pad = M
    else:
        # Production case: tile rows; weights stay fully resident in VMEM.
        # TODO(synk): at real proposal counts also cast x/w1/w2 to bf16 (f32
        # accumulation via preferred_element_type) for v6e/v7x MXU throughput.
        tm = row_tile
        m_pad = pl.cdiv(M, tm) * tm
        if m_pad != M:
            xf = jnp.pad(xf, ((0, m_pad - M), (0, 0)))

    grid_rows = m_pad // tm

    out_padded = pl.pallas_call(
        _detector_kernel,
        out_shape=jax.ShapeDtypeStruct((m_pad, O_PAD), jnp.float32),
        grid_spec=pl.GridSpec(
            grid=(grid_rows,),
            in_specs=[
                pl.BlockSpec((tm, C), lambda i: (i, 0)),   # streaming rows
                pl.BlockSpec((C, H), lambda i: (0, 0)),    # weights: resident
                pl.BlockSpec((1, H), lambda i: (0, 0)),
                pl.BlockSpec((H, O_PAD), lambda i: (0, 0)),
                pl.BlockSpec((1, O_PAD), lambda i: (0, 0)),
            ],
            out_specs=pl.BlockSpec((tm, O_PAD), lambda i: (i, 0)),
        ),
        compiler_params=pltpu.CompilerParams(
            dimension_semantics=("parallel",)),
    )(xf, w1, b1, w2p, b2p)

    return out_padded[:M, :out_dim].reshape(B, N, out_dim)


class CaptionNetPallas:
    """Port of CaptionNet with freeze_detector=True, captioner=None."""

    def __init__(self, key, in_dim=32, hidden=64, nlatent_query=32):
        self.freeze_detector = True
        self.captioner = None
        # TODO(synk): detector/captioner submodules are importlib-loaded and not
        # provided; the Q-Former latent queries (nlatent_query) are unused on the
        # captioner=None path implemented here.
        self.nlatent_query = nlatent_query
        out_dim = 8 * 3  # 8 box corners x 3 coords per proposal
        k1, k2, k3, k4 = jax.random.split(key, 4)
        self.w1 = jax.random.normal(k1, (in_dim, hidden), jnp.float32) * 0.05
        self.b1 = jax.random.normal(k2, (1, hidden), jnp.float32) * 0.01
        self.w2 = jax.random.normal(k3, (hidden, out_dim), jnp.float32) * 0.05
        self.b2 = jax.random.normal(k4, (1, out_dim), jnp.float32) * 0.01

    def forward(self, batch_data_label, is_eval=False, task_name=None, n_splits=4):
        x = batch_data_label['proposal_features']          # (B, N, C)
        B, N, _ = x.shape

        # Detector (frozen): Pallas-fused MLP -> per-proposal box corners.
        flat = detector_forward(x, self.w1, self.b1, self.w2, self.b2)  # (B, N, 24)
        outputs = {'box_corners': flat.reshape(B, N, 8, 3)}

        # freeze_detector=True => loss is replaced by an exact zero scalar.
        outputs['loss'] = jnp.zeros((), jnp.float32)

        # captioner is None branch (string glue, no device compute):
        batch, nproposals, _, _ = outputs['box_corners'].shape
        outputs['lang_cap'] = [['this is a valid match!'] * nproposals] * batch
        return outputs


if __name__ == "__main__":
    key = jax.random.PRNGKey(0)
    kx, kp = jax.random.split(key)

    B, N, C = 2, 16, 32  # batch=2, 16 proposals, 32-dim proposal features
    x = jax.random.normal(kx, (B, N, C), jnp.float32)
    batch_data_label = {'proposal_features': x}

    model = CaptionNetPallas(kp, in_dim=C, hidden=64, nlatent_query=32)
    outputs = model.forward(batch_data_label, is_eval=True)

    jax.block_until_ready(outputs['box_corners'])
    jax.block_until_ready(outputs['loss'])

    # Pure-JAX reference check for the detector MLP.
    h_ref = jnp.maximum(x.reshape(B * N, C) @ model.w1 + model.b1, 0.0)
    y_ref = (h_ref @ model.w2 + model.b2).reshape(B, N, 8, 3)
    assert jnp.allclose(outputs['box_corners'], y_ref, atol=1e-5, rtol=1e-5)

    assert outputs['box_corners'].shape == (B, N, 8, 3)
    assert float(outputs['loss']) == 0.0
    assert len(outputs['lang_cap']) == B and len(outputs['lang_cap'][0]) == N

    print("KERNEL_OK")
</pallas_src>

<mosaic_0001>
module attributes {stable_mosaic.version = 11 : i64} {
  func.func @_detector_kernel(%arg0: i32, %arg1: memref<32x32xf32, #tpu.memory_space<vmem>>, %arg2: memref<32x64xf32, #tpu.memory_space<vmem>>, %arg3: memref<1x64xf32, #tpu.memory_space<vmem>>, %arg4: memref<64x128xf32, #tpu.memory_space<vmem>>, %arg5: memref<1x128xf32, #tpu.memory_space<vmem>>, %arg6: memref<32x128xf32, #tpu.memory_space<vmem>>) attributes {dimension_semantics = [#tpu.dimension_semantics<parallel>], iteration_bounds = array<i64: 1>, scalar_prefetch = 0 : i64, scratch_operands = 0 : i64, tpu.core_type = #tpu.core_type<tc>, window_params = [{transform_indices = @transform_0, window_bounds = array<i64: 32, 32>}, {pipeline_mode = #tpu.pipeline_mode<synchronous>, transform_indices = @transform_1, window_bounds = array<i64: 32, 64>}, {pipeline_mode = #tpu.pipeline_mode<synchronous>, transform_indices = @transform_2, window_bounds = array<i64: 1, 64>}, {pipeline_mode = #tpu.pipeline_mode<synchronous>, transform_indices = @transform_3, window_bounds = array<i64: 64, 128>}, {pipeline_mode = #tpu.pipeline_mode<synchronous>, transform_indices = @transform_4, window_bounds = array<i64: 1, 128>}, {transform_indices = @transform_5, window_bounds = array<i64: 32, 128>}]} {
    %c0 = arith.constant 0 : index
    %c0_0 = arith.constant 0 : index
    %0 = vector.load %arg1[%c0, %c0_0] : memref<32x32xf32, #tpu.memory_space<vmem>>, vector<32x32xf32>
    %c0_1 = arith.constant 0 : index
    %c0_2 = arith.constant 0 : index
    %1 = vector.load %arg2[%c0_1, %c0_2] : memref<32x64xf32, #tpu.memory_space<vmem>>, vector<32x64xf32>
    %cst = arith.constant dense<0.000000e+00> : vector<32x64xf32>
    %2 = tpu.matmul %0, %1, %cst {dimension_numbers = #tpu.dot_dimension_numbers<[1], [0], [0], [1], [0, 0, 1, 1], [], []>} : vector<32x32xf32>, vector<32x64xf32>, vector<32x64xf32> -> vector<32x64xf32>
    %c0_3 = arith.constant 0 : index
    %c0_4 = arith.constant 0 : index
    %3 = vector.load %arg3[%c0_3, %c0_4] : memref<1x64xf32, #tpu.memory_space<vmem>>, vector<1x64xf32>
    %4 = vector.broadcast %3 : vector<1x64xf32> to vector<32x64xf32>
    %5 = arith.addf %2, %4 : vector<32x64xf32>
    %cst_5 = arith.constant 0.000000e+00 : f32
    %6 = vector.broadcast %cst_5 : f32 to vector<32x64xf32>
    %7 = arith.maximumf %5, %6 : vector<32x64xf32>
    %c0_6 = arith.constant 0 : index
    %c0_7 = arith.constant 0 : index
    %8 = vector.load %arg4[%c0_6, %c0_7] : memref<64x128xf32, #tpu.memory_space<vmem>>, vector<64x128xf32>
    %cst_8 = arith.constant dense<0.000000e+00> : vector<32x128xf32>
    %9 = tpu.matmul %7, %8, %cst_8 {dimension_numbers = #tpu.dot_dimension_numbers<[1], [0], [0], [1], [0, 0, 1, 1], [], []>} : vector<32x64xf32>, vector<64x128xf32>, vector<32x128xf32> -> vector<32x128xf32>
    %c0_9 = arith.constant 0 : index
    %c0_10 = arith.constant 0 : index
    %10 = vector.load %arg5[%c0_9, %c0_10] : memref<1x128xf32, #tpu.memory_space<vmem>>, vector<1x128xf32>
    %11 = vector.broadcast %10 : vector<1x128xf32> to vector<32x128xf32>
    %12 = arith.addf %9, %11 : vector<32x128xf32>
    %c0_11 = arith.constant 0 : index
    %c0_12 = arith.constant 0 : index
    %13 = vector.load %arg6[%c0_11, %c0_12] : memref<32x128xf32, #tpu.memory_space<vmem>>, vector<32x128xf32>
    tpu.vector_store %arg6[%c0_11, %c0_12], %12 {strides = array<i32>} : memref<32x128xf32, #tpu.memory_space<vmem>>, vector<32x128xf32>,
    return
  }
  func.func @transform_0(%arg0: i32) -> (i32, i32) {
    %c0_i32 = arith.constant 0 : i32
    %c0_i32_0 = arith.constant 0 : i32
    return %arg0, %c0_i32 : i32, i32
  }
  func.func @transform_1(%arg0: i32) -> (i32, i32) {
    %c0_i32 = arith.constant 0 : i32
    %c0_i32_0 = arith.constant 0 : i32
    %c0_i32_1 = arith.constant 0 : i32
    return %c0_i32, %c0_i32_0 : i32, i32
  }
  func.func @transform_2(%arg0: i32) -> (i32, i32) {
    %c0_i32 = arith.constant 0 : i32
    %c0_i32_0 = arith.constant 0 : i32
    %c0_i32_1 = arith.constant 0 : i32
    return %c0_i32, %c0_i32_0 : i32, i32
  }
  func.func @transform_3(%arg0: i32) -> (i32, i32) {
    %c0_i32 = arith.constant 0 : i32
    %c0_i32_0 = arith.constant 0 : i32
    %c0_i32_1 = arith.constant 0 : i32
    return %c0_i32, %c0_i32_0 : i32, i32
  }
  func.func @transform_4(%arg0: i32) -> (i32, i32) {
    %c0_i32 = arith.constant 0 : i32
    %c0_i32_0 = arith.constant 0 : i32
    %c0_i32_1 = arith.constant 0 : i32
    return %c0_i32, %c0_i32_0 : i32, i32
  }
  func.func @transform_5(%arg0: i32) -> (i32, i32) {
    %c0_i32 = arith.constant 0 : i32
    %c0_i32_0 = arith.constant 0 : i32
    return %arg0, %c0_i32 : i32, i32
  }
}

</mosaic_0001>

<llo_original>
// kernel: tpu_custom_call.1
$region0: #{tpu_custom_call.1}
  #allocation0 [shape = 'u32[]', space=smem, size = 0x4, offset = 0x4, fixed_abs, tag = 'smem constant byte address 0x4 - core index']
  #allocation1 [shape = 'u32[72,128]{1,0:T(1,128)}', space=vmem, size = 0x9000, scoped, tag = 'internal scratch']
  %s0 = inlined_call_operand.hbm [shape: f32[32,32], index: 0, kind: input, shape index: {}]
  %s1 = inlined_call_operand.hbm [shape: f32[32,64], index: 1, kind: input, shape index: {}]
  %s2 = inlined_call_operand.vmem [shape: f32[1,64], index: 2, kind: input, shape index: {}]
  %s3 = inlined_call_operand.hbm [shape: f32[64,128], index: 3, kind: input, shape index: {}]
  %s4 = inlined_call_operand.vmem [shape: f32[1,128], index: 4, kind: input, shape index: {}]
  %s5 = inlined_call_operand.hbm [shape: f32[32,128], index: 5, kind: output, shape index: {}]
  %s6 = sld [smem:[#allocation0]]
  $region42: #{tpu_custom_call.1} parent=0
    _
  %s8 = ssub.s32 1, %s6
  %s9 = scalar_select 0, %s8, %s6
  $region1: #{tpu_custom_call.1} parent=0
    #allocation2 [shape = 'u8[16384]{0}', space=vmem, size = 0x4000, scoped, tag = 'input window, operand 0, single buffered']
    #allocation3 [shape = 's32[1]{0}', space=sflag, size = 0x4, scoped, tag = 'scoped memory for tpu_custom_call.1']
    #allocation4 [shape = 's32[1]{0}', space=sflag, size = 0x4, scoped, tag = 'scoped memory for tpu_custom_call.1']
    #allocation5 [shape = 'u8[16384]{0}', space=vmem, size = 0x4000, scoped, tag = 'input window, operand 1, single buffered']
    #allocation6 [shape = 's32[1]{0}', space=sflag, size = 0x4, scoped, tag = 'scoped memory for tpu_custom_call.1']
    #allocation7 [shape = 'u8[32768]{0}', space=vmem, size = 0x8000, scoped, tag = 'input window, operand 3, single buffered']
    #allocation8 [shape = 'u8[16384]{0}', space=vmem, size = 0x4000, scoped, tag = 'output window, operand 0, single buffered']
    %10 = vsyncpa [#allocation3], 0
    %11 = vsyncpa [#allocation6], 0
    %12 = vsyncpa [#allocation4], 0
    // Predicated region
    $region2: #{tpu_custom_call.1} parent=1 // pred_check
      _
    $region3: #{tpu_custom_call.1} parent=1 // pred_check_branch
      %14 = sbr.rel (0) target = $region5
    $region4: #{tpu_custom_call.1} parent=1 // pred_region
      %16 = vsyncadd [#allocation3], 0
      %s17 = sshll.u32 %s0, 4
      %s18 = int_to_ptr.hbm [resolvable:$true] %s17
      %s19 = sshll.u32 [#allocation2], 4
      %s20 = int_to_ptr.vmem [resolvable:$true] %s19
      %25 = dma.hbm_to_vmem [thread:$0]  %s18, 512, %s20, [#allocation3], 128, 128, 8
    $region5: #{tpu_custom_call.1} parent=1 // pred_fallthru
      _
    // Predicated region
    $region6: #{tpu_custom_call.1} parent=1 // pred_check
      _
    $region7: #{tpu_custom_call.1} parent=1 // pred_check_branch
      %27 = sbr.rel (0) target = $region9
    $region8: #{tpu_custom_call.1} parent=1 // pred_region
      %29 = vsyncadd [#allocation6], 0
      %s30 = sshll.u32 %s1, 4
      %s31 = int_to_ptr.hbm [resolvable:$true] %s30
      %s32 = sshll.u32 [#allocation5], 4
      %s33 = int_to_ptr.vmem [resolvable:$true] %s32
      %38 = dma.hbm_to_vmem [thread:$0]  %s31, 512, %s33, [#allocation6], 128, 128, 8
    $region9: #{tpu_custom_call.1} parent=1 // pred_fallthru
      _
    // Predicated region
    $region10: #{tpu_custom_call.1} parent=1 // pred_check
      _
    $region11: #{tpu_custom_call.1} parent=1 // pred_check_branch
      %40 = sbr.rel (0) target = $region13
    $region12: #{tpu_custom_call.1} parent=1 // pred_region
      _
    $region13: #{tpu_custom_call.1} parent=1 // pred_fallthru
      _
    // Predicated region
    $region14: #{tpu_custom_call.1} parent=1 // pred_check
      _
    $region15: #{tpu_custom_call.1} parent=1 // pred_check_branch
      %42 = sbr.rel (0) target = $region17
    $region16: #{tpu_custom_call.1} parent=1 // pred_region
      %44 = vsyncadd [#allocation6], 0
      %s45 = sshll.u32 %s3, 4
      %s46 = int_to_ptr.hbm [resolvable:$true] %s45
      %s47 = sshll.u32 [#allocation7], 4
      %s48 = int_to_ptr.vmem [resolvable:$true] %s47
      %53 = dma.hbm_to_vmem [thread:$0]  %s46, 1024, %s48, [#allocation6], 128, 128, 8
    $region17: #{tpu_custom_call.1} parent=1 // pred_fallthru
      _
    // Predicated region
    $region18: #{tpu_custom_call.1} parent=1 // pred_check
      _
    $region19: #{tpu_custom_call.1} parent=1 // pred_check_branch
      %55 = sbr.rel (0) target = $region21
    $region20: #{tpu_custom_call.1} parent=1 // pred_region
      _
    $region21: #{tpu_custom_call.1} parent=1 // pred_fallthru
      _
    // Predicated region
    $region22: #{tpu_custom_call.1} parent=1 // pred_check
      _
    $region23: #{tpu_custom_call.1} parent=1 // pred_check_branch
      %57 = sbr.rel (0) target = $region25
    $region24: #{tpu_custom_call.1} parent=1 // pred_region
      %59 = dma.done [#allocation3], 512
    $region25: #{tpu_custom_call.1} parent=1 // pred_fallthru
      _
    // Predicated region
    $region26: #{tpu_custom_call.1} parent=1 // pred_check
      _
    $region27: #{tpu_custom_call.1} parent=1 // pred_check_branch
      %61 = sbr.rel (0) target = $region29
    $region28: #{tpu_custom_call.1} parent=1 // pred_region
      %63 = dma.done [#allocation6], 512
    $region29: #{tpu_custom_call.1} parent=1 // pred_fallthru
      _
    // Predicated region
    $region30: #{tpu_custom_call.1} parent=1 // pred_check
      _
    $region31: #{tpu_custom_call.1} parent=1 // pred_check_branch
      %65 = sbr.rel (0) target = $region33
    $region32: #{tpu_custom_call.1} parent=1 // pred_region
      %67 = dma.done [#allocation6], 1024
    $region33: #{tpu_custom_call.1} parent=1 // pred_fallthru
      _
    %v68 = vld [vmem:[#allocation2] sm:$0xff]
    %v69 = vld [vmem:[#allocation2 + $0x8] sm:$0xff]
    %v70 = vld [vmem:[#allocation2 + $0x10] sm:$0xff]
    %v71 = vld [vmem:[#allocation2 + $0x18] sm:$0xff]
    %v72 = vld [vmem:[#allocation5] sm:$0xff]
    %v73 = vld [vmem:[#allocation5 + $0x8] sm:$0xff]
    %v74 = vld [vmem:[#allocation5 + $0x10] sm:$0xff]
    %v75 = vld [vmem:[#allocation5 + $0x18] sm:$0xff]
    %v76 = vld [vmem:[%s2] sm:$0x1]
    %v78 = vperm.slane %v76, 0
    %vm80 = vcmask 261120
    %v82 = vsel %vm80, %v68, 0
    %v85 = vsel %vm80, %v69, 0
    %v88 = vsel %vm80, %v70, 0
    %v91 = vsel %vm80, %v71, 0
    %93 = vmatpush.msra.mxu0 0.0
    %94 = vmatpush.msra.mxu0 0.0
    %95 = vmatpush.msra.mxu0 0.0
    %96 = vmatpush.msra.mxu0 0.0
    %97 = vmatpush.msra.mxu0 0.0
    %98 = vmatpush.msra.mxu0 0.0
    %99 = vmatpush.msra.mxu0 0.0
    %100 = vmatpush.msra.mxu0 0.0
    %101 = vmatpush.msra.mxu0 0.0
    %102 = vmatpush.msra.mxu0 0.0
    %103 = vmatpush.msra.mxu0 0.0
    %104 = vmatpush.msra.mxu0 0.0
    %105 = vmatpush.msra.mxu0 %v75
    %106 = vmatpush.msra.mxu0 %v74
    %107 = vmatpush.msra.mxu0 %v73
    %108 = vmatpush.msra.mxu0 %v72
    %109 = vmatmul.f32.gmra.mxu0 %v82
    %v110 = vpop.f32.mrf.mxu0
    %v111 = vadd.f32 %v78, %v110
    %112 = vmatmul.f32.gmra.mxu0 %v85
    %v113 = vpop.f32.mrf.mxu0
    %v114 = vadd.f32 %v78, %v113
    %115 = vmatmul.f32.gmra.mxu0 %v88
    %v116 = vpop.f32.mrf.mxu0
    %v117 = vadd.f32 %v78, %v116
    %118 = vmatmul.f32.gmra.mxu0 %v91
    %v119 = vpop.f32.mrf.mxu0
    %v120 = vadd.f32 %v78, %v119
    %121 = vdwg.mxu0
    %v122 = vmax.f32 %v111, 0.0
    %v123 = vmax.f32 %v114, 0.0
    %v124 = vmax.f32 %v117, 0.0
    %v125 = vmax.f32 %v120, 0.0
    %v126 = vld [vmem:[#allocation7] sm:$0xff]
    %v127 = vld [vmem:[#allocation7 + $0x8] sm:$0xff]
    %v128 = vld [vmem:[#allocation7 + $0x10] sm:$0xff]
    %v129 = vld [vmem:[#allocation7 + $0x18] sm:$0xff]
    %v130 = vld [vmem:[#allocation7 + $0x20] sm:$0xff]
    %v131 = vld [vmem:[#allocation7 + $0x28] sm:$0xff]
    %v132 = vld [vmem:[#allocation7 + $0x30] sm:$0xff]
    %v133 = vld [vmem:[#allocation7 + $0x38] sm:$0xff]
    %v134 = vld [vmem:[%s4] sm:$0x1]
    %v136 = vperm.slane %v134, 0
    %vm138 = vcmask 523264
    %v140 = vsel %vm138, %v122, 0
    %v143 = vsel %vm138, %v123, 0
    %v146 = vsel %vm138, %v124, 0
    %v149 = vsel %vm138, %v125, 0
    %151 = vmatpush.msra.mxu0 0.0
    %152 = vmatpush.msra.mxu0 0.0
    %153 = vmatpush.msra.mxu0 0.0
    %154 = vmatpush.msra.mxu0 0.0
    %155 = vmatpush.msra.mxu0 0.0
    %156 = vmatpush.msra.mxu0 0.0
    %157 = vmatpush.msra.mxu0 0.0
    %158 = vmatpush.msra.mxu0 0.0
    %159 = vmatpush.msra.mxu0 %v133
    %160 = vmatpush.msra.mxu0 %v132
    %161 = vmatpush.msra.mxu0 %v131
    %162 = vmatpush.msra.mxu0 %v130
    %163 = vmatpush.msra.mxu0 %v129
    %164 = vmatpush.msra.mxu0 %v128
    %165 = vmatpush.msra.mxu0 %v127
    %166 = vmatpush.msra.mxu0 %v126
    %167 = vmatmul.f32.gmra.mxu0 %v140
    %v168 = vpop.f32.mrf.mxu0
    %v169 = vadd.f32 %v136, %v168
    %170 = vmatmul.f32.gmra.mxu0 %v143
    %v171 = vpop.f32.mrf.mxu0
    %v172 = vadd.f32 %v136, %v171
    %173 = vmatmul.f32.gmra.mxu0 %v146
    %v174 = vpop.f32.mrf.mxu0
    %v175 = vadd.f32 %v136, %v174
    %176 = vmatmul.f32.gmra.mxu0 %v149
    %v177 = vpop.f32.mrf.mxu0
    %v178 = vadd.f32 %v136, %v177
    %179 = vdwg.mxu0
    %180 = vst [vmem:[#allocation8] sm:$0xff] %v169
    %181 = vst [vmem:[#allocation8 + $0x8] sm:$0xff] %v172
    %182 = vst [vmem:[#allocation8 + $0x10] sm:$0xff] %v175
    %183 = vst [vmem:[#allocation8 + $0x18] sm:$0xff] %v178
    // Predicated region
    $region34: #{tpu_custom_call.1} parent=1 // pred_check
      _
    $region35: #{tpu_custom_call.1} parent=1 // pred_check_branch
      %185 = sbr.rel (0) target = $region37
    $region36: #{tpu_custom_call.1} parent=1 // pred_region
      %187 = vsyncadd [#allocation4], 0
      %s188 = sshll.u32 [#allocation8], 4
      %s189 = int_to_ptr.vmem [resolvable:$true] %s188
      %s190 = sshll.u32 %s5, 4
      %s191 = int_to_ptr.hbm [resolvable:$true] %s190
      %196 = dma.vmem_to_hbm [thread:$0]  %s189, 512, %s191, [#allocation4], 128, 128, 8
    $region37: #{tpu_custom_call.1} parent=1 // pred_fallthru
      _
    // Predicated region
    $region38: #{tpu_custom_call.1} parent=1 // pred_check
      _
    $region39: #{tpu_custom_call.1} parent=1 // pred_check_branch
      %198 = sbr.rel (0) target = $region41
    $region40: #{tpu_custom_call.1} parent=1 // pred_region
      %200 = dma.done [#allocation4], 512
    $region41: #{tpu_custom_call.1} parent=1 // pred_fallthru
      _
    %201 = vsyncpa [#allocation3], 1
    %202 = vsyncpa [#allocation6], 1
    %203 = vsyncpa [#allocation4], 1

</llo_original>
